<compile_context>
chip_gen: v5e
topology: v5e:2x2
jax: 0.10.0
libtpu: 0.0.40
codegen_flags: <defaults>
</compile_context>

<pallas_src>
import functools

import jax
import jax.numpy as jnp
from jax.experimental import pallas as pl
from jax.experimental.pallas import tpu as pltpu


DMA_WINDOW = 8  # max in-flight row-gather DMAs per grid step


def _prompt_concat_kernel(
    ids_ref,      # SMEM int32 [B*S]     flattened token ids (scalar prefetch)
    soft_hbm,     # HBM  [n_tokens, D]   soft prompt weights (memory_space=pl.ANY)
    table_hbm,    # HBM  [V, D]          embedding table     (memory_space=pl.ANY)
    out_ref,      # VMEM [1, tile_t, D]  current output tile
    sems,         # DMA semaphores [window]
    *,
    n_tokens, seq_len, vocab, tile_t, window,
):
    b = pl.program_id(0)
    ti = pl.program_id(1)
    t_base = ti * tile_t                 # global output row of local row 0
    total_t = n_tokens + seq_len

    def dst(r):
        # (1, D) view of local output row r — DMA destination, no vector stores.
        return out_ref.at[0, pl.ds(r, 1), :]

    def start_row(r, slot):
        t = t_base + r

        @pl.when(t < n_tokens)
        def _():
            # Soft-prompt row, fetched straight from HBM into the output tile.
            pltpu.make_async_copy(
                soft_hbm.at[pl.ds(t, 1), :], dst(r), sems.at[slot]
            ).start()

        @pl.when(jnp.logical_and(t >= n_tokens, t < total_t))
        def _():
            tok = ids_ref[b * seq_len + (t - n_tokens)]
            tok = jnp.minimum(jnp.maximum(tok, 0), vocab - 1)  # clamp OOB ids
            pltpu.make_async_copy(
                table_hbm.at[pl.ds(tok, 1), :], dst(r), sems.at[slot]
            ).start()

    def wait_row(r, slot):
        t = t_base + r

        @pl.when(t < total_t)
        def _():
            # Only shape/dtype/sem matter for the wait; reuse a table-row descriptor.
            pltpu.make_async_copy(
                table_hbm.at[pl.ds(0, 1), :], dst(r), sems.at[slot]
            ).wait()

    # Prime the first `window` row DMAs.
    @pl.loop(0, window)
    def _(r):
        start_row(r, r)

    # Rolling window: wait for row r, immediately reuse its slot for row r + window.
    @pl.loop(0, tile_t)
    def _(r):
        slot = r % window
        wait_row(r, slot)

        @pl.when(r + window < tile_t)
        def _():
            start_row(r + window, slot)


def cat_learned_embedding_to_input_ids(input_ids, embed_table, soft_prompt, *, tile_t=None):
    """Pallas implementation of PromptTuningWrapper._cat_learned_embedding_to_input_ids."""
    B, S = input_ids.shape
    n_tokens, D = soft_prompt.shape
    V, _ = embed_table.shape
    assert soft_prompt.dtype == embed_table.dtype
    T = n_tokens + S

    if tile_t is None:
        # Size the output tile so double-buffered tiles stay far below v7x's 64 MiB VMEM.
        row_bytes = D * jnp.dtype(embed_table.dtype).itemsize
        tile_t = max(8, min(512, (4 * 1024 * 1024) // max(row_bytes, 1)))
    tile_t = min(tile_t, -(-T // 8) * 8)      # no bigger than T rounded up to 8
    tile_t = max(8, (tile_t // 8) * 8)        # multiple of 8 sublanes
    window = min(DMA_WINDOW, tile_t)

    # Flat 1-D ids avoid 2-D SMEM padding; index as b * S + j inside the kernel.
    ids_flat = input_ids.reshape(-1).astype(jnp.int32)

    kernel = functools.partial(
        _prompt_concat_kernel,
        n_tokens=n_tokens, seq_len=S, vocab=V, tile_t=tile_t, window=window,
    )

    return pl.pallas_call(
        kernel,
        out_shape=jax.ShapeDtypeStruct((B, T, D), embed_table.dtype),
        grid_spec=pltpu.PrefetchScalarGridSpec(
            num_scalar_prefetch=1,                       # flattened input_ids -> SMEM
            grid=(B, pl.cdiv(T, tile_t)),
            in_specs=[
                pl.BlockSpec(memory_space=pl.ANY),       # soft prompt stays in HBM
                pl.BlockSpec(memory_space=pl.ANY),       # embedding table stays in HBM
            ],
            out_specs=pl.BlockSpec((1, tile_t, D), lambda b, ti, ids: (b, ti, 0)),
            scratch_shapes=[pltpu.SemaphoreType.DMA((window,))],
        ),
        compiler_params=pltpu.CompilerParams(
            dimension_semantics=("parallel", "arbitrary"),
        ),
    )(ids_flat, soft_prompt, embed_table)


def extend_attention_mask(attention_mask, n_tokens):
    """PromptTuningWrapper._extend_attention_mask (pure concat glue -> plain JAX)."""
    if attention_mask.ndim == 1:
        attention_mask = attention_mask[None, :]
    B = attention_mask.shape[0]
    ones = jnp.ones((B, n_tokens), dtype=attention_mask.dtype)
    return jnp.concatenate([ones, attention_mask], axis=1)


def prompt_tuning_forward(input_ids, attention_mask, embed_table, soft_prompt):
    """Wrapper-level forward: inputs_embeds + extended attention mask — exactly what
    PromptTuningWrapper computes before delegating to base_model.forward."""
    n_tokens = soft_prompt.shape[0]
    inputs_embeds = cat_learned_embedding_to_input_ids(input_ids, embed_table, soft_prompt)
    ext_mask = extend_attention_mask(attention_mask, n_tokens)
    return inputs_embeds, ext_mask


if __name__ == "__main__":
    # Small deterministic setup consistent with the module.
    B, S, D, V = 2, 12, 128, 64
    N_TOKENS = 4                         # prompt_tuning_config.n_tokens

    key = jax.random.PRNGKey(0)
    k_tab, k_ids = jax.random.split(key)

    # Base model's input embedding table (deterministic synthetic weights).
    embed_table = jax.random.normal(k_tab, (V, D), dtype=jnp.float32)
    # initialize_from_vocab=True: soft prompt = first n_tokens rows of the table.
    soft_prompt = embed_table[:N_TOKENS]

    input_ids = jax.random.randint(k_ids, (B, S), 0, V, dtype=jnp.int32)
    attention_mask = jnp.ones((B, S), dtype=jnp.int32)

    inputs_embeds, ext_mask = prompt_tuning_forward(
        input_ids, attention_mask, embed_table, soft_prompt
    )
    inputs_embeds = jax.block_until_ready(inputs_embeds)
    ext_mask = jax.block_until_ready(ext_mask)

    # Reference check (plain JAX) — same semantics as the PyTorch module.
    ref_embeds = jnp.concatenate(
        [jnp.broadcast_to(soft_prompt[None], (B, N_TOKENS, D)), embed_table[input_ids]],
        axis=1,
    )
    ref_mask = jnp.concatenate(
        [jnp.ones((B, N_TOKENS), dtype=attention_mask.dtype), attention_mask], axis=1
    )

    assert inputs_embeds.shape == (B, N_TOKENS + S, D)
    assert ext_mask.shape == (B, N_TOKENS + S)
    assert jnp.allclose(inputs_embeds, ref_embeds)
    assert jnp.array_equal(ext_mask, ref_mask)

    print("KERNEL_OK")
</pallas_src>

<mosaic_0001>
module attributes {stable_mosaic.version = 11 : i64} {
  func.func @_prompt_concat_kernel(%arg0: i32, %arg1: i32, %arg2: memref<24xi32, #tpu.memory_space<smem>>, %arg3: memref<4x128xf32, #tpu.memory_space<any>>, %arg4: memref<64x128xf32, #tpu.memory_space<any>>, %arg5: memref<1x16x128xf32, #tpu.memory_space<vmem>>, %arg6: memref<8x!tpu.dma_semaphore, #tpu.memory_space<semaphore_mem>>) attributes {dimension_semantics = [#tpu.dimension_semantics<parallel>, #tpu.dimension_semantics<arbitrary>], iteration_bounds = array<i64: 2, 1>, scalar_prefetch = 1 : i64, scratch_operands = 1 : i64, tpu.core_type = #tpu.core_type<tc>, window_params = [{}, {}, {transform_indices = @transform_2, window_bounds = array<i64: 1, 16, 128>}]} {
    %c16_i32 = arith.constant 16 : i32
    %0 = arith.muli %arg1, %c16_i32 : i32
    %c0_i32 = arith.constant 0 : i32
    %c8_i32 = arith.constant 8 : i32
    %1 = arith.addi %c0_i32, %c8_i32 : i32
    %c1_i32 = arith.constant 1 : i32
    scf.for %arg7 = %c0_i32 to %1 step %c1_i32  : i32 {
      %c1_i32_5 = arith.constant 1 : i32
      %3 = arith.muli %arg7, %c1_i32_5 : i32
      %c0_i32_6 = arith.constant 0 : i32
      %4 = arith.addi %c0_i32_6, %3 : i32
      %5 = arith.addi %0, %4 : i32
      %c4_i32 = arith.constant 4 : i32
      %6 = arith.cmpi slt, %5, %c4_i32 : i32
      %7 = arith.extui %6 : i1 to i32
      %c0_i32_7 = arith.constant 0 : i32
      %8 = arith.cmpi ne, %7, %c0_i32_7 : i32
      scf.if %8 {
        %c0_i32_11 = arith.constant 0 : i32
        %c0_i32_12 = arith.constant 0 : i32
        %14 = tpu.memref_slice %arg3[%5, %c0_i32_12] : memref<4x128xf32, #tpu.memory_space<any>> -> memref<1x128xf32, #tpu.memory_space<any>>
        %c0_i32_13 = arith.constant 0 : i32
        %15 = tpu.memref_slice %arg5[%c0_i32_11, %4, %c0_i32_13] : memref<1x16x128xf32, #tpu.memory_space<vmem>> -> memref<1x1x128xf32, #tpu.memory_space<vmem>>
        %16 = tpu.memref_squeeze %15 : memref<1x1x128xf32, #tpu.memory_space<vmem>> -> memref<1x128xf32, #tpu.memory_space<vmem>>
        %17 = tpu.memref_slice %arg6[%4] : memref<8x!tpu.dma_semaphore, #tpu.memory_space<semaphore_mem>> -> memref<1x!tpu.dma_semaphore, #tpu.memory_space<semaphore_mem>>
        %18 = tpu.memref_squeeze %17 : memref<1x!tpu.dma_semaphore, #tpu.memory_space<semaphore_mem>> -> memref<!tpu.dma_semaphore, #tpu.memory_space<semaphore_mem>>
        tpu.enqueue_dma source(%14 : memref<1x128xf32, #tpu.memory_space<any>>) target(%16 : memref<1x128xf32, #tpu.memory_space<vmem>>) target_semaphore(%18 : memref<!tpu.dma_semaphore, #tpu.memory_space<semaphore_mem>>)
      } else {
      }
      %c4_i32_8 = arith.constant 4 : i32
      %9 = arith.cmpi sge, %5, %c4_i32_8 : i32
      %c16_i32_9 = arith.constant 16 : i32
      %10 = arith.cmpi slt, %5, %c16_i32_9 : i32
      %11 = arith.andi %9, %10 : i1
      %12 = arith.extui %11 : i1 to i32
      %c0_i32_10 = arith.constant 0 : i32
      %13 = arith.cmpi ne, %12, %c0_i32_10 : i32
      scf.if %13 {
        %c12_i32 = arith.constant 12 : i32
        %14 = arith.muli %arg0, %c12_i32 : i32
        %c4_i32_11 = arith.constant 4 : i32
        %15 = arith.subi %5, %c4_i32_11 : i32
        %16 = arith.addi %14, %15 : i32
        %17 = arith.index_cast %16 : i32 to index
        %18 = memref.load %arg2[%17] : memref<24xi32, #tpu.memory_space<smem>>
        %c0_i32_12 = arith.constant 0 : i32
        %19 = arith.maxsi %18, %c0_i32_12 : i32
        %c63_i32 = arith.constant 63 : i32
        %20 = arith.minsi %19, %c63_i32 : i32
        %c0_i32_13 = arith.constant 0 : i32
        %c0_i32_14 = arith.constant 0 : i32
        %21 = tpu.memref_slice %arg4[%20, %c0_i32_14] : memref<64x128xf32, #tpu.memory_space<any>> -> memref<1x128xf32, #tpu.memory_space<any>>
        %c0_i32_15 = arith.constant 0 : i32
        %22 = tpu.memref_slice %arg5[%c0_i32_13, %4, %c0_i32_15] : memref<1x16x128xf32, #tpu.memory_space<vmem>> -> memref<1x1x128xf32, #tpu.memory_space<vmem>>
        %23 = tpu.memref_squeeze %22 : memref<1x1x128xf32, #tpu.memory_space<vmem>> -> memref<1x128xf32, #tpu.memory_space<vmem>>
        %24 = tpu.memref_slice %arg6[%4] : memref<8x!tpu.dma_semaphore, #tpu.memory_space<semaphore_mem>> -> memref<1x!tpu.dma_semaphore, #tpu.memory_space<semaphore_mem>>
        %25 = tpu.memref_squeeze %24 : memref<1x!tpu.dma_semaphore, #tpu.memory_space<semaphore_mem>> -> memref<!tpu.dma_semaphore, #tpu.memory_space<semaphore_mem>>
        tpu.enqueue_dma source(%21 : memref<1x128xf32, #tpu.memory_space<any>>) target(%23 : memref<1x128xf32, #tpu.memory_space<vmem>>) target_semaphore(%25 : memref<!tpu.dma_semaphore, #tpu.memory_space<semaphore_mem>>)
      } else {
      }
    }
    %c8_i32_0 = arith.constant 8 : i32
    %c0_i32_1 = arith.constant 0 : i32
    %c16_i32_2 = arith.constant 16 : i32
    %2 = arith.addi %c0_i32_1, %c16_i32_2 : i32
    %c1_i32_3 = arith.constant 1 : i32
    scf.for %arg7 = %c0_i32_1 to %2 step %c1_i32_3  : i32 {
      %c1_i32_5 = arith.constant 1 : i32
      %3 = arith.muli %arg7, %c1_i32_5 : i32
      %c0_i32_6 = arith.constant 0 : i32
      %4 = arith.addi %c0_i32_6, %3 : i32
      %c8_i32_7 = arith.constant 8 : i32
      %c0_i32_8 = arith.constant 0 : i32
      %5 = arith.cmpi eq, %c8_i32_7, %c0_i32_8 : i32
      %c1_i32_9 = arith.constant 1 : i32
      %6 = arith.select %5, %c1_i32_9, %c8_i32_7 : i32
      %7 = arith.remsi %4, %6 : i32
      %c0_i32_10 = arith.constant 0 : i32
      %8 = arith.cmpi ne, %7, %c0_i32_10 : i32
      %c0_i32_11 = arith.constant 0 : i32
      %9 = arith.cmpi slt, %7, %c0_i32_11 : i32
      %c0_i32_12 = arith.constant 0 : i32
      %10 = arith.cmpi slt, %6, %c0_i32_12 : i32
      %11 = arith.xori %9, %10 : i1
      %12 = arith.andi %11, %8 : i1
      %13 = arith.addi %7, %6 : i32
      %14 = arith.select %12, %13, %7 : i32
      %15 = arith.addi %0, %4 : i32
      %c16_i32_13 = arith.constant 16 : i32
      %16 = arith.cmpi slt, %15, %c16_i32_13 : i32
      %17 = arith.extui %16 : i1 to i32
      %c0_i32_14 = arith.constant 0 : i32
      %18 = arith.cmpi ne, %17, %c0_i32_14 : i32
      scf.if %18 {
        %c0_i32_18 = arith.constant 0 : i32
        %c0_i32_19 = arith.constant 0 : i32
        %c0_i32_20 = arith.constant 0 : i32
        %23 = tpu.memref_slice %arg4[%c0_i32_19, %c0_i32_20] : memref<64x128xf32, #tpu.memory_space<any>> -> memref<1x128xf32, #tpu.memory_space<any>>
        %c0_i32_21 = arith.constant 0 : i32
        %24 = tpu.memref_slice %arg5[%c0_i32_18, %4, %c0_i32_21] : memref<1x16x128xf32, #tpu.memory_space<vmem>> -> memref<1x1x128xf32, #tpu.memory_space<vmem>>
        %25 = tpu.memref_squeeze %24 : memref<1x1x128xf32, #tpu.memory_space<vmem>> -> memref<1x128xf32, #tpu.memory_space<vmem>>
        %26 = tpu.memref_slice %arg6[%14] : memref<8x!tpu.dma_semaphore, #tpu.memory_space<semaphore_mem>> -> memref<1x!tpu.dma_semaphore, #tpu.memory_space<semaphore_mem>>
        %27 = tpu.memref_squeeze %26 : memref<1x!tpu.dma_semaphore, #tpu.memory_space<semaphore_mem>> -> memref<!tpu.dma_semaphore, #tpu.memory_space<semaphore_mem>>
        tpu.wait_dma2 semaphore(%27 : memref<!tpu.dma_semaphore, #tpu.memory_space<semaphore_mem>>) src(%23 : memref<1x128xf32, #tpu.memory_space<any>>) dst(%25 : memref<1x128xf32, #tpu.memory_space<vmem>>)
      } else {
      }
      %c8_i32_15 = arith.constant 8 : i32
      %19 = arith.addi %4, %c8_i32_15 : i32
      %c16_i32_16 = arith.constant 16 : i32
      %20 = arith.cmpi slt, %19, %c16_i32_16 : i32
      %21 = arith.extui %20 : i1 to i32
      %c0_i32_17 = arith.constant 0 : i32
      %22 = arith.cmpi ne, %21, %c0_i32_17 : i32
      scf.if %22 {
        %c8_i32_18 = arith.constant 8 : i32
        %23 = arith.addi %4, %c8_i32_18 : i32
        %24 = arith.addi %0, %23 : i32
        %c4_i32 = arith.constant 4 : i32
        %25 = arith.cmpi slt, %24, %c4_i32 : i32
        %26 = arith.extui %25 : i1 to i32
        %c0_i32_19 = arith.constant 0 : i32
        %27 = arith.cmpi ne, %26, %c0_i32_19 : i32
        scf.if %27 {
          %c0_i32_23 = arith.constant 0 : i32
          %c0_i32_24 = arith.constant 0 : i32
          %33 = tpu.memref_slice %arg3[%24, %c0_i32_24] : memref<4x128xf32, #tpu.memory_space<any>> -> memref<1x128xf32, #tpu.memory_space<any>>
          %c0_i32_25 = arith.constant 0 : i32
          %34 = tpu.memref_slice %arg5[%c0_i32_23, %23, %c0_i32_25] : memref<1x16x128xf32, #tpu.memory_space<vmem>> -> memref<1x1x128xf32, #tpu.memory_space<vmem>>
          %35 = tpu.memref_squeeze %34 : memref<1x1x128xf32, #tpu.memory_space<vmem>> -> memref<1x128xf32, #tpu.memory_space<vmem>>
          %36 = tpu.memref_slice %arg6[%14] : memref<8x!tpu.dma_semaphore, #tpu.memory_space<semaphore_mem>> -> memref<1x!tpu.dma_semaphore, #tpu.memory_space<semaphore_mem>>
          %37 = tpu.memref_squeeze %36 : memref<1x!tpu.dma_semaphore, #tpu.memory_space<semaphore_mem>> -> memref<!tpu.dma_semaphore, #tpu.memory_space<semaphore_mem>>
          tpu.enqueue_dma source(%33 : memref<1x128xf32, #tpu.memory_space<any>>) target(%35 : memref<1x128xf32, #tpu.memory_space<vmem>>) target_semaphore(%37 : memref<!tpu.dma_semaphore, #tpu.memory_space<semaphore_mem>>)
        } else {
        }
        %c4_i32_20 = arith.constant 4 : i32
        %28 = arith.cmpi sge, %24, %c4_i32_20 : i32
        %c16_i32_21 = arith.constant 16 : i32
        %29 = arith.cmpi slt, %24, %c16_i32_21 : i32
        %30 = arith.andi %28, %29 : i1
        %31 = arith.extui %30 : i1 to i32
        %c0_i32_22 = arith.constant 0 : i32
        %32 = arith.cmpi ne, %31, %c0_i32_22 : i32
        scf.if %32 {
          %c12_i32 = arith.constant 12 : i32
          %33 = arith.muli %arg0, %c12_i32 : i32
          %c4_i32_23 = arith.constant 4 : i32
          %34 = arith.subi %24, %c4_i32_23 : i32
          %35 = arith.addi %33, %34 : i32
          %36 = arith.index_cast %35 : i32 to index
          %37 = memref.load %arg2[%36] : memref<24xi32, #tpu.memory_space<smem>>
          %c0_i32_24 = arith.constant 0 : i32
          %38 = arith.maxsi %37, %c0_i32_24 : i32
          %c63_i32 = arith.constant 63 : i32
          %39 = arith.minsi %38, %c63_i32 : i32
          %c0_i32_25 = arith.constant 0 : i32
          %c0_i32_26 = arith.constant 0 : i32
          %40 = tpu.memref_slice %arg4[%39, %c0_i32_26] : memref<64x128xf32, #tpu.memory_space<any>> -> memref<1x128xf32, #tpu.memory_space<any>>
          %c0_i32_27 = arith.constant 0 : i32
          %41 = tpu.memref_slice %arg5[%c0_i32_25, %23, %c0_i32_27] : memref<1x16x128xf32, #tpu.memory_space<vmem>> -> memref<1x1x128xf32, #tpu.memory_space<vmem>>
          %42 = tpu.memref_squeeze %41 : memref<1x1x128xf32, #tpu.memory_space<vmem>> -> memref<1x128xf32, #tpu.memory_space<vmem>>
          %43 = tpu.memref_slice %arg6[%14] : memref<8x!tpu.dma_semaphore, #tpu.memory_space<semaphore_mem>> -> memref<1x!tpu.dma_semaphore, #tpu.memory_space<semaphore_mem>>
          %44 = tpu.memref_squeeze %43 : memref<1x!tpu.dma_semaphore, #tpu.memory_space<semaphore_mem>> -> memref<!tpu.dma_semaphore, #tpu.memory_space<semaphore_mem>>
          tpu.enqueue_dma source(%40 : memref<1x128xf32, #tpu.memory_space<any>>) target(%42 : memref<1x128xf32, #tpu.memory_space<vmem>>) target_semaphore(%44 : memref<!tpu.dma_semaphore, #tpu.memory_space<semaphore_mem>>)
        } else {
        }
      } else {
      }
    }
    %c16_i32_4 = arith.constant 16 : i32
    return
  }
  func.func @transform_2(%arg0: i32, %arg1: i32, %arg2: memref<24xi32, #tpu.memory_space<smem>>) -> (i32, i32, i32) {
    %c0_i32 = arith.constant 0 : i32
    %c0_i32_0 = arith.constant 0 : i32
    return %arg0, %arg1, %c0_i32 : i32, i32, i32
  }
}

</mosaic_0001>

<llo_original>
// kernel: tpu_custom_call.1
$region0: #{tpu_custom_call.1}
  #allocation0 [shape = 'u32[]', space=smem, size = 0x4, offset = 0x4, fixed_abs, tag = 'smem constant byte address 0x4 - core index']
  #allocation1 [shape = 'u32[72,128]{1,0:T(1,128)}', space=vmem, size = 0x9000, scoped, tag = 'internal scratch']
  #allocation2 [shape = 's32[8]{0}', space=sflag, size = 0x20, scoped, tag = 'scratch operand']
  #allocation3 [shape = 's32[1]{0}', space=sflag, size = 0x4, scoped, tag = 'scoped memory for tpu_custom_call.1']
  #allocation4 [shape = 'u8[512]{0}', space=smem, size = 0x200, scoped, tag = 'prefetched SMEM operand 0']
  #allocation7 [shape = 's32[]', space=sflag, size = 0x4, offset = 0, fixed_abs, tag = 'sflag constant byte address 0x0 - dummy sync flag']
  #allocation8 [shape = 's32[]', space=sflag, size = 0x4, offset = 0, fixed_abs, tag = 'sflag constant byte address 0x0 - dummy sync flag']
  #allocation9 [shape = 'u32[]', space=smem, size = 0x4, offset = 0x44, fixed_abs, tag = 'smem constant byte address 0x44 - assertion arg 0']
  #allocation10 [shape = 'u32[]', space=smem, size = 0x4, offset = 0x48, fixed_abs, tag = 'smem constant byte address 0x48 - assertion arg 1']
  #allocation11 [shape = 's32[]', space=sflag, size = 0x4, offset = 0, fixed_abs, tag = 'sflag constant byte address 0x0 - dummy sync flag']
  #allocation12 [shape = 's32[]', space=sflag, size = 0x4, offset = 0, fixed_abs, tag = 'sflag constant byte address 0x0 - dummy sync flag']
  #allocation13 [shape = 's32[]', space=sflag, size = 0x4, offset = 0, fixed_abs, tag = 'sflag constant byte address 0x0 - dummy sync flag']
  #allocation14 [shape = 's32[]', space=sflag, size = 0x4, offset = 0, fixed_abs, tag = 'sflag constant byte address 0x0 - dummy sync flag']
  #allocation15 [shape = 's32[]', space=sflag, size = 0x4, offset = 0, fixed_abs, tag = 'sflag constant byte address 0x0 - dummy sync flag']
  #allocation16 [shape = 's32[]', space=sflag, size = 0x4, offset = 0, fixed_abs, tag = 'sflag constant byte address 0x0 - dummy sync flag']
  %s0 = inlined_call_operand.hbm [shape: s32[24], index: 0, kind: input, shape index: {}]
  %s1 = inlined_call_operand.hbm [shape: f32[4,128], index: 1, kind: input, shape index: {}]
  %s2 = inlined_call_operand.hbm [shape: f32[64,128], index: 2, kind: input, shape index: {}]
  %s3 = inlined_call_operand.hbm [shape: f32[2,16,128], index: 3, kind: output, shape index: {}]
  %s4 = sld [smem:[#allocation0]]
  $region79: #{tpu_custom_call.1} parent=0
    _
  %s6 = ssub.s32 1, %s4
  %s7 = scalar_select 0, %s6, %s4
  %s9 = sshll.u32 %s0, 4
  %s10 = int_to_ptr.hbm [resolvable:$true] %s9
  %12 = dma.hbm_to_smem %s10, 16, [#allocation4], [#allocation3]
  %14 = dma.done [#allocation3], 16
  %15 = sfence
  $region1: #{tpu_custom_call.1} parent=0
    #allocation5 [shape = 'u8[16384]{0}', space=vmem, size = 0x4000, scoped, tag = 'output window, operand 0']
    #allocation6 [shape = 's32[2]{0}', space=sflag, size = 0x8, scoped, tag = 'scoped memory for tpu_custom_call.1']
    %16 = vsyncpa [#allocation6], 0
    %s17 = scalar_lea.sflag [#allocation6], 1
    %18 = vsyncpa %s17, 0
    loop: start=0, step=1, limit=3
    $region2: #{tpu_custom_call.1} parent=1 // loop_pre_header
      _
    $region3: #{tpu_custom_call.1} parent=1 // loop_header
      %s20 = sphi 0, %s24
      %p21 = scmp.ge.s32.totalorder %s20, 3
      %s26 = sphi 0, %s36
      %s27 = sphi 0, %s32
      %s28 = sphi 0, %s26
      %s29 = sphi 0, %s27
      %s41 = sphi 0, %s43
      %s44 = sphi 0, %s41
      %s54 = sphi 0, %s44
    $region4: #{tpu_custom_call.1} parent=1 // loop_header_branch
      %23 = sbr.rel (%p21) target = $region8
    $region5: #{tpu_custom_call.1} parent=1 // loop_body
      %s25 = ssub.s32 %s20, 1
      %s30 = sadd.s32 1, %s27
      %p31 = scmp.ge.s32.totalorder %s30, 1
      %s32 = scalar_select %p31, 0, %s30
      %s33 = sadd.s32 1, %s26
      %s34 = scalar_select %p31, %s33, %s26
      %p35 = scmp.ge.s32.totalorder %s34, 2
      %s36 = scalar_select %p35, 0, %s34
      %s37 = ssub.s32 %s26, %s36
      %s38 = ssub.s32 %s27, %s32
      %s39 = sor.u32 %s37, %s38
      %p40 = scmp.eq.s32.totalorder %s39, 0
      %s42 = sadd.s32 %s41, 1
      %s43 = scalar_select %p40, %s41, %s42
      %p45 = pneg %p40
      %p46 = scmp.eq.s32.totalorder %s20, 1
      %p47 = por %p45, %p46
      %p48 = scmp.ne.s32.totalorder %s41, %s44
      %p49 = scmp.eq.s32.totalorder %s20, 0
      %p50 = por %p48, %p49
      %p51 = scmp.ne.s32.totalorder %s41, %s44
      %p52 = scmp.eq.s32.totalorder %s25, 1
      %p53 = por %p51, %p52
      %p55 = scmp.ne.s32.totalorder %s44, %s54
      %p56 = scmp.eq.s32.totalorder %s25, 0
      %p57 = por %p55, %p56
      %p58 = scmp.lt.s32.totalorder %s20, 2
      // Predicated region
      $region9: #{tpu_custom_call.1} parent=5 // pred_check
        %p59 = pneg %p58
      $region10: #{tpu_custom_call.1} parent=5 // pred_check_branch
        %61 = sbr.rel (%p59) target = $region12
      $region11: #{tpu_custom_call.1} parent=5 // pred_region
        %p62 = pneg %p50
        %p63 = pneg %p47
        %s64 = sand.u32 %s41, 1
        %s65 = scalar_lea.sflag [#allocation6], %s64
        %s66 = sand.u32 %s41, 1
        %s67 = smul.addr %s66, 16
        %s68 = scalar_lea.vmem [#allocation5], %s67
        %s69 = smul.u32 2, %s27
        %s70 = smul.u32 %s27, 16
        loop: start=0, step=1, limit=8
        $region13: #{tpu_custom_call.1} parent=11 // loop_pre_header
          _
        $region14: #{tpu_custom_call.1} parent=11 // loop_header
          %s72 = sphi 0, %s76
          %p73 = scmp.ge.s32.totalorder %s72, 8
        $region15: #{tpu_custom_call.1} parent=11 // loop_header_branch
          %75 = sbr.rel (%p73) target = $region19
        $region16: #{tpu_custom_call.1} parent=11 // loop_body
          %s77 = sadd.s32 %s70, %s72
          %p78 = scmp.lt.s32.totalorder %s77, 4
          // Predicated region
          $region20: #{tpu_custom_call.1} parent=16 // pred_check
            %p79 = pneg %p78
          $region21: #{tpu_custom_call.1} parent=16 // pred_check_branch
            %81 = sbr.rel (%p79) target = $region23
          $region22: #{tpu_custom_call.1} parent=16 // pred_region
            %s82 = scalar_lea.hbm %s1, %s77
            %s83 = scalar_lea.vmem %s68, %s72 [#allocation5]
            %s84 = scalar_lea.sflag [#allocation2], %s72
            // Predicated region
            $region24: #{tpu_custom_call.1} parent=22 // pred_check
              _
            $region25: #{tpu_custom_call.1} parent=22 // pred_check_branch
              %86 = sbr.rel target = $region27
            $region26: #{tpu_custom_call.1} parent=22 // pred_region
              %87 = sst [smem:[#allocation9]] [#allocation8]
              %88 = sst [smem:[#allocation10]] [#allocation7]
            $region27: #{tpu_custom_call.1} parent=22 // pred_fallthru
              _
            %90 = shalt.err (0)
            %s92 = sshll.u32 %s82, 4
            %s93 = int_to_ptr.hbm [resolvable:$true] %s92
            %s94 = sshll.u32 %s83, 4
            %s95 = int_to_ptr.vmem [resolvable:$true] %s94
            %97 = dma.hbm_to_vmem [thread:$0]  %s93, 16, %s95, %s84
          $region23: #{tpu_custom_call.1} parent=16 // pred_fallthru
            _
          %p98 = scmp.ge.s32.totalorder %s77, 4
          %p99 = scmp.lt.s32.totalorder %s77, 16
          %p100 = pnand %p98, %p99
          %p101 = pneg %p100
          // Predicated region
          $region28: #{tpu_custom_call.1} parent=16 // pred_check
            _
          $region29: #{tpu_custom_call.1} parent=16 // pred_check_branch
            %103 = sbr.rel (%p100) target = $region31
          $region30: #{tpu_custom_call.1} parent=16 // pred_region
            %s104 = smul.u32 %s26, 12
            %s105 = ssub.s32 %s77, 4
            %s106 = sadd.s32 %s104, %s105
            %s107 = sld [smem:[#allocation4 + %s106]]
            %p108 = scmp.gt.s32.totalorder %s107, 0
            %s109 = scalar_select %p108, %s107, 0
            %p110 = scmp.lt.s32.totalorder %s109, 63
            %s111 = scalar_select %p110, %s109, 63
            %s112 = scalar_lea.hbm %s2, %s111
            %s113 = scalar_lea.vmem %s68, %s72 [#allocation5]
            %s114 = scalar_lea.sflag [#allocation2], %s72
            // Predicated region
            $region32: #{tpu_custom_call.1} parent=30 // pred_check
              _
            $region33: #{tpu_custom_call.1} parent=30 // pred_check_branch
              %116 = sbr.rel target = $region35
            $region34: #{tpu_custom_call.1} parent=30 // pred_region
              %117 = sst [smem:[#allocation9]] [#allocation12]
              %118 = sst [smem:[#allocation10]] [#allocation11]
            $region35: #{tpu_custom_call.1} parent=30 // pred_fallthru
              _
            %120 = shalt.err (0)
            %s122 = sshll.u32 %s112, 4
            %s123 = int_to_ptr.hbm [resolvable:$true] %s122
            %s124 = sshll.u32 %s113, 4
            %s125 = int_to_ptr.vmem [resolvable:$true] %s124
            %127 = dma.hbm_to_vmem [thread:$0]  %s123, 16, %s125, %s114
          $region31: #{tpu_custom_call.1} parent=16 // pred_fallthru
            _
        $region17: #{tpu_custom_call.1} parent=11 // loop_footer
          %s76 = sadd.s32 1, %s72
        $region18: #{tpu_custom_call.1} parent=11 // loop_footer_branch
          %71 = sbr.rel target = $region14
        $region19: #{tpu_custom_call.1} parent=11 // loop_exit
          _
        loop: start=0, step=1, limit=16
        $region36: #{tpu_custom_call.1} parent=11 // loop_pre_header
          _
        $region37: #{tpu_custom_call.1} parent=11 // loop_header
          %s129 = sphi 0, %s133
          %p130 = scmp.ge.s32.totalorder %s129, 16
        $region38: #{tpu_custom_call.1} parent=11 // loop_header_branch
          %132 = sbr.rel (%p130) target = $region42
        $region39: #{tpu_custom_call.1} parent=11 // loop_body
          %p134 = scmp.lt.s32.totalorder %s129, 0
          %s135 = ssub.s32 0, %s129
          %s136 = scalar_select %p134, %s135, %s129
          %s137 = sand.u32 %s136, 7
          %s138 = ssub.s32 0, %s137
          %s139 = scalar_select %p134, %s138, %s137
          %p140 = scmp.ne.s32.totalorder %s139, 0
          %p141 = scmp.lt.s32.totalorder %s139, 0
          %p142 = pnand %p141, %p140
          %p143 = pneg %p142
          %s144 = sadd.s32 %s139, 8
          %s145 = scalar_select %p143, %s144, %s139
          %s146 = sadd.s32 %s70, %s129
          %p147 = scmp.lt.s32.totalorder %s146, 16
          // Predicated region
          $region43: #{tpu_custom_call.1} parent=39 // pred_check
            %p148 = pneg %p147
          $region44: #{tpu_custom_call.1} parent=39 // pred_check_branch
            %150 = sbr.rel (%p148) target = $region46
          $region45: #{tpu_custom_call.1} parent=39 // pred_region
            %s151 = scalar_lea.sflag [#allocation2], %s145
            %s152 = smul.u32 1, 1
            %s153 = sshll.u32 %s152, 4
            %154 = dma.done %s151, %s153
          $region46: #{tpu_custom_call.1} parent=39 // pred_fallthru
            _
          %s155 = sadd.s32 %s129, 8
          %p156 = scmp.lt.s32.totalorder %s155, 16
          // Predicated region
          $region47: #{tpu_custom_call.1} parent=39 // pred_check
            %p157 = pneg %p156
          $region48: #{tpu_custom_call.1} parent=39 // pred_check_branch
            %159 = sbr.rel (%p157) target = $region50
          $region49: #{tpu_custom_call.1} parent=39 // pred_region
            %s160 = sadd.s32 %s70, %s155
            %p161 = scmp.lt.s32.totalorder %s160, 4
            // Predicated region
            $region51: #{tpu_custom_call.1} parent=49 // pred_check
              %p162 = pneg %p161
            $region52: #{tpu_custom_call.1} parent=49 // pred_check_branch
              %164 = sbr.rel (%p162) target = $region54
            $region53: #{tpu_custom_call.1} parent=49 // pred_region
              %s165 = scalar_lea.hbm %s1, %s160
              %s166 = scalar_lea.vmem %s68, %s155 [#allocation5]
              %s167 = scalar_lea.sflag [#allocation2], %s145
              // Predicated region
              $region55: #{tpu_custom_call.1} parent=53 // pred_check
                _
              $region56: #{tpu_custom_call.1} parent=53 // pred_check_branch
                %169 = sbr.rel target = $region58
              $region57: #{tpu_custom_call.1} parent=53 // pred_region
                %170 = sst [smem:[#allocation9]] [#allocation14]
                %171 = sst [smem:[#allocation10]] [#allocation13]
              $region58: #{tpu_custom_call.1} parent=53 // pred_fallthru
                _
              %173 = shalt.err (0)
              %s175 = sshll.u32 %s165, 4
              %s176 = int_to_ptr.hbm [resolvable:$true] %s175
              %s177 = sshll.u32 %s166, 4
              %s178 = int_to_ptr.vmem [resolvable:$true] %s177
              %180 = dma.hbm_to_vmem [thread:$0]  %s176, 16, %s178, %s167
            $region54: #{tpu_custom_call.1} parent=49 // pred_fallthru
              _
            %p181 = scmp.ge.s32.totalorder %s160, 4
            %p182 = scmp.lt.s32.totalorder %s160, 16
            %p183 = pnand %p181, %p182
            %p184 = pneg %p183
            // Predicated region
            $region59: #{tpu_custom_call.1} parent=49 // pred_check
              _
            $region60: #{tpu_custom_call.1} parent=49 // pred_check_branch
              %186 = sbr.rel (%p183) target = $region62
            $region61: #{tpu_custom_call.1} parent=49 // pred_region
              %s187 = smul.u32 %s26, 12
              %s188 = ssub.s32 %s160, 4
              %s189 = sadd.s32 %s187, %s188
              %s190 = sld [smem:[#allocation4 + %s189]]
              %p191 = scmp.gt.s32.totalorder %s190, 0
              %s192 = scalar_select %p191, %s190, 0
              %p193 = scmp.lt.s32.totalorder %s192, 63
              %s194 = scalar_select %p193, %s192, 63
              %s195 = scalar_lea.hbm %s2, %s194
              %s196 = scalar_lea.vmem %s68, %s155 [#allocation5]
              %s197 = scalar_lea.sflag [#allocation2], %s145
              // Predicated region
              $region63: #{tpu_custom_call.1} parent=61 // pred_check
                _
              $region64: #{tpu_custom_call.1} parent=61 // pred_check_branch
                %199 = sbr.rel target = $region66
              $region65: #{tpu_custom_call.1} parent=61 // pred_region
                %200 = sst [smem:[#allocation9]] [#allocation16]
                %201 = sst [smem:[#allocation10]] [#allocation15]
              $region66: #{tpu_custom_call.1} parent=61 // pred_fallthru
                _
              %203 = shalt.err (0)
              %s205 = sshll.u32 %s195, 4
              %s206 = int_to_ptr.hbm [resolvable:$true] %s205
              %s207 = sshll.u32 %s196, 4
              %s208 = int_to_ptr.vmem [resolvable:$true] %s207
              %210 = dma.hbm_to_vmem [thread:$0]  %s206, 16, %s208, %s197
            $region62: #{tpu_custom_call.1} parent=49 // pred_fallthru
              _
          $region50: #{tpu_custom_call.1} parent=39 // pred_fallthru
            _
        $region40: #{tpu_custom_call.1} parent=11 // loop_footer
          %s133 = sadd.s32 1, %s129
        $region41: #{tpu_custom_call.1} parent=11 // loop_footer_branch
          %128 = sbr.rel target = $region37
        $region42: #{tpu_custom_call.1} parent=11 // loop_exit
          _
        %s211 = sand.u32 %s41, 1
        %s212 = scalar_lea.sflag [#allocation6], %s211
        %s213 = sand.u32 %s41, 1
        %s214 = smul.addr %s213, 16
        %s215 = scalar_lea.vmem [#allocation5], %s214
        // Predicated region
        $region67: #{tpu_custom_call.1} parent=11 // pred_check
          %p216 = pneg %p47
        $region68: #{tpu_custom_call.1} parent=11 // pred_check_branch
          %218 = sbr.rel (%p216) target = $region70
        $region69: #{tpu_custom_call.1} parent=11 // pred_region
          %s219 = smul.u32 2, %s27
          %221 = vsyncadd %s212, 0
          %s222 = smul.addr %s26, 2
          %s223 = sadd.s32 %s219, %s222
          %s224 = smul.addr %s223, 8
          %s225 = scalar_lea.hbm %s3, %s224
          %s226 = sshll.u32 %s215, 4
          %s227 = int_to_ptr.vmem [resolvable:$true] %s226
          %s228 = sshll.u32 %s225, 4
          %s229 = int_to_ptr.hbm [resolvable:$true] %s228
          %234 = dma.vmem_to_hbm [thread:$0]  %s227, 256, %s229, %s212, 128, 128, 8
        $region70: #{tpu_custom_call.1} parent=11 // pred_fallthru
          _
      $region12: #{tpu_custom_call.1} parent=5 // pred_fallthru
        _
      %p235 = scmp.le.s32.totalorder 1, %s20
      // Predicated region
      $region71: #{tpu_custom_call.1} parent=5 // pred_check
        %p236 = pneg %p235
      $region72: #{tpu_custom_call.1} parent=5 // pred_check_branch
        %238 = sbr.rel (%p236) target = $region74
      $region73: #{tpu_custom_call.1} parent=5 // pred_region
        %s239 = ssub.s32 %s20, 1
        // Predicated region
        $region75: #{tpu_custom_call.1} parent=73 // pred_check
          %p240 = pneg %p53
        $region76: #{tpu_custom_call.1} parent=73 // pred_check_branch
          %242 = sbr.rel (%p240) target = $region78
        $region77: #{tpu_custom_call.1} parent=73 // pred_region
          %s243 = sand.u32 %s44, 1
          %s244 = scalar_lea.sflag [#allocation6], %s243
          %s245 = sand.u32 %s44, 1
          %s246 = smul.addr %s245, 16
          %s247 = scalar_lea.vmem [#allocation5], %s246
          %249 = dma.done %s244, 256
        $region78: #{tpu_custom_call.1} parent=73 // pred_fallthru
          _
      $region74: #{tpu_custom_call.1} parent=5 // pred_fallthru
        _
    $region6: #{tpu_custom_call.1} parent=1 // loop_footer
      %s24 = sadd.s32 1, %s20
    $region7: #{tpu_custom_call.1} parent=1 // loop_footer_branch
      %19 = sbr.rel target = $region3
    $region8: #{tpu_custom_call.1} parent=1 // loop_exit
      _
    %250 = vsyncpa [#allocation6], 1
    %s251 = scalar_lea.sflag [#allocation6], 1
    %252 = vsyncpa %s251, 1
  %253 = vsyncmov [#allocation2]
  %s254 = vpop.sfrf %253
  %p255 = scmp.eq.s32.totalorder %s254, 0
  %p256 = pneg %p255
  %258 = shalt.err (%p256)
  %s259 = scalar_lea.sflag [#allocation2], 1
  %260 = vsyncmov %s259
  %s261 = vpop.sfrf %260
  %p262 = scmp.eq.s32.totalorder %s261, 0
  %p263 = pneg %p262
  %265 = shalt.err (%p263)
  %s266 = scalar_lea.sflag [#allocation2], 2
  %267 = vsyncmov %s266
  %s268 = vpop.sfrf %267
  %p269 = scmp.eq.s32.totalorder %s268, 0
  %p270 = pneg %p269
  %272 = shalt.err (%p270)
  %s273 = scalar_lea.sflag [#allocation2], 3
  %274 = vsyncmov %s273
  %s275 = vpop.sfrf %274
  %p276 = scmp.eq.s32.totalorder %s275, 0
  %p277 = pneg %p276
  %279 = shalt.err (%p277)
  %s280 = scalar_lea.sflag [#allocation2], 4
  %281 = vsyncmov %s280
  %s282 = vpop.sfrf %281
  %p283 = scmp.eq.s32.totalorder %s282, 0
  %p284 = pneg %p283
  %286 = shalt.err (%p284)
  %s287 = scalar_lea.sflag [#allocation2], 5
  %288 = vsyncmov %s287
  %s289 = vpop.sfrf %288
  %p290 = scmp.eq.s32.totalorder %s289, 0
  %p291 = pneg %p290
  %293 = shalt.err (%p291)
  %s294 = scalar_lea.sflag [#allocation2], 6
  %295 = vsyncmov %s294
  %s296 = vpop.sfrf %295
  %p297 = scmp.eq.s32.totalorder %s296, 0
  %p298 = pneg %p297
  %300 = shalt.err (%p298)
  %s301 = scalar_lea.sflag [#allocation2], 7
  %302 = vsyncmov %s301
  %s303 = vpop.sfrf %302
  %p304 = scmp.eq.s32.totalorder %s303, 0
  %p305 = pneg %p304
  %307 = shalt.err (%p305)

</llo_original>
